<compile_context>
chip_gen: v5e
topology: v5e:2x2
jax: 0.10.0
libtpu: 0.0.40
codegen_flags: <defaults>
</compile_context>

<pallas_src>
import jax
import jax.numpy as jnp
from jax.experimental import pallas as pl
from jax.experimental.pallas import tpu as pltpu


# ----------------------------------------------------------------------------
# helpers
# ----------------------------------------------------------------------------
def _round_up(v: int, m: int) -> int:
    return (v + m - 1) // m * m


_FAST_PATH_BYTES = 2 * 1024 * 1024   # below this, let XLA slice / fuse it
_MAX_DMA_CHUNKS = 8                  # overlapped row-slab DMAs per call
_MIN_DMA_CHUNK_BYTES = 512 * 1024    # don't split slabs smaller than this

# Set to False the first time the direct-DMA path fails to lower; after that we
# fall back permanently to the (previously validated) VMEM-staged tiled copy.
_DMA_PATH_OK = True


def _row_chunks(rows: int, l_out: int, dtype_bytes: int, dma_chunks=None):
    """Static (start, size) row slabs for the overlapped HBM->HBM DMAs."""
    row_bytes = max(1, l_out * dtype_bytes)
    if dma_chunks is not None:
        n = max(1, min(int(dma_chunks), rows))
    else:
        by_size = max(1, (rows * row_bytes) // _MIN_DMA_CHUNK_BYTES)
        n = int(min(_MAX_DMA_CHUNKS, by_size, rows))
    base = -(-rows // n)  # ceil
    if rows >= 8 * n:
        base = _round_up(base, 8)  # keep slab starts sublane-tile aligned
    chunks = []
    r = 0
    while r < rows:
        sz = min(base, rows - r)
        chunks.append((r, sz))
        r += sz
    return chunks


# ----------------------------------------------------------------------------
# primary path: grid-less direct HBM -> HBM strided DMA
# ----------------------------------------------------------------------------
def _make_chomp_dma_kernel(row_chunks, l_out: int):
    def kernel(x_hbm, o_hbm, sems):
        # Issue all row-slab copies first so the DMA engine can overlap them,
        # then wait.  Source window skips the chomped tail (cols [0, l_out)).
        copies = []
        for idx, (r0, rs) in enumerate(row_chunks):
            cp = pltpu.make_async_copy(
                x_hbm.at[pl.ds(r0, rs), pl.ds(0, l_out)],
                o_hbm.at[pl.ds(r0, rs), :],
                sems.at[idx],
            )
            cp.start()
            copies.append(cp)
        for cp in copies:
            cp.wait()

    return kernel


def _chomp_rows_dma(x2: jax.Array, rows: int, l_out: int, dtype_bytes: int,
                    dma_chunks=None) -> jax.Array:
    chunks = _row_chunks(rows, l_out, dtype_bytes, dma_chunks)
    kernel = _make_chomp_dma_kernel(chunks, l_out)
    return pl.pallas_call(
        kernel,
        out_shape=jax.ShapeDtypeStruct((rows, l_out), x2.dtype),
        in_specs=[pl.BlockSpec(memory_space=pl.ANY)],   # stay in HBM, no auto-DMA
        out_specs=pl.BlockSpec(memory_space=pl.ANY),    # written directly by DMA
        scratch_shapes=[pltpu.SemaphoreType.DMA((len(chunks),))],
        cost_estimate=pl.CostEstimate(
            flops=0,
            transcendentals=0,
            bytes_accessed=2 * rows * l_out * dtype_bytes,
        ),
    )(x2)


# ----------------------------------------------------------------------------
# fallback path: tiled VMEM-staged streaming copy (previously validated)
# ----------------------------------------------------------------------------
def _chomp_copy_kernel(x_ref, o_ref):
    # Pure streaming copy of one (TR, TL) tile; identical in/out index_maps.
    o_ref[...] = x_ref[...]


def _chomp_rows_tiled(x2: jax.Array, rows: int, l_out: int,
                      dtype_bytes: int) -> jax.Array:
    # Lane tile: multiple of 128 (unmasked vector stores); larger cap once the
    # length axis is long enough to benefit from longer contiguous DMA segments.
    tl_cap = 4096 if l_out > 2048 else 2048
    tl = min(tl_cap, _round_up(l_out, 128))
    # Row tile: multiple of the dtype's sublane packing (8 f32 / 16 bf16 / 32 i8).
    sublane = max(8, 32 // dtype_bytes)
    budget_bytes = 4 * 1024 * 1024  # 4 MiB block -> 16 MiB with in+out double-buffering
    tr = max(sublane, (budget_bytes // (tl * dtype_bytes)) // sublane * sublane)
    tr = min(tr, _round_up(rows, sublane))
    # Megacore (v7x): make sure there are >= 2 blocks along a parallel axis.
    if pl.cdiv(rows, tr) == 1 and pl.cdiv(l_out, tl) == 1 and rows > sublane:
        tr = _round_up(pl.cdiv(rows, 2), sublane)

    grid = (pl.cdiv(rows, tr), pl.cdiv(l_out, tl))
    return pl.pallas_call(
        _chomp_copy_kernel,
        out_shape=jax.ShapeDtypeStruct((rows, l_out), x2.dtype),
        grid=grid,
        in_specs=[pl.BlockSpec((tr, tl), lambda i, j: (i, j))],
        out_specs=pl.BlockSpec((tr, tl), lambda i, j: (i, j)),
        compiler_params=pltpu.CompilerParams(
            dimension_semantics=("parallel", "parallel"),
            vmem_limit_bytes=24 << 20,  # headroom for the 16 MiB of buffering
        ),
        cost_estimate=pl.CostEstimate(
            flops=0,
            transcendentals=0,
            bytes_accessed=2 * rows * l_out * dtype_bytes,
        ),
    )(x2)


# ----------------------------------------------------------------------------
# public wrapper (Chomp1d.forward equivalent)
# ----------------------------------------------------------------------------
def chomp1d(x: jax.Array, chomp_size: int, *, force_kernel: bool = False,
            dma_chunks=None) -> jax.Array:
    """Equivalent of Chomp1d.forward: x[:, :, :-chomp_size].contiguous()."""
    if chomp_size < 0:
        raise ValueError("chomp_size must be non-negative")
    if chomp_size == 0:
        return x
    if x.ndim != 3:
        raise ValueError("expected (N, C, L) input")
    n, c, l = x.shape
    l_out = l - chomp_size
    if l_out <= 0:
        raise ValueError("chomp_size must be smaller than the length axis")

    dtype_bytes = jnp.dtype(x.dtype).itemsize
    rows = n * c
    out_bytes = rows * l_out * dtype_bytes

    # Small-input fast path: pallas_call launch/pipeline setup would dominate;
    # let XLA emit the slice (and ideally fuse it into a neighboring op).
    if not force_kernel and out_bytes < _FAST_PATH_BYTES:
        return jax.lax.slice(x, (0, 0, 0), (n, c, l_out))

    # Contiguous NCL -> free collapse of (N, C) into a single row axis.
    x2 = x.reshape(rows, l)

    global _DMA_PATH_OK
    if _DMA_PATH_OK:
        try:
            out2 = _chomp_rows_dma(x2, rows, l_out, dtype_bytes, dma_chunks)
        except Exception:
            # Direct HBM->HBM DMA failed to lower on this backend; fall back to
            # the tiled VMEM-staged copy (correct everywhere, slightly slower).
            _DMA_PATH_OK = False
            out2 = _chomp_rows_tiled(x2, rows, l_out, dtype_bytes)
    else:
        out2 = _chomp_rows_tiled(x2, rows, l_out, dtype_bytes)

    return out2.reshape(n, c, l_out)


# ----------------------------------------------------------------------------
# self-test
# ----------------------------------------------------------------------------
if __name__ == "__main__":
    key = jax.random.PRNGKey(0)

    # Primary check: TCN-block-like shape (batch=2, ch=4, len=16), Pallas path.
    chomp_size = 3
    x = jax.random.normal(key, (2, 4, 16), dtype=jnp.float32)
    out = jax.block_until_ready(chomp1d(x, chomp_size, force_kernel=True))
    ref = x[:, :, :-chomp_size]
    assert out.shape == (2, 4, 16 - chomp_size), out.shape
    assert out.dtype == x.dtype
    assert bool(jnp.array_equal(out, ref))

    # Non-128-aligned length, multiple overlapped row-slab DMAs forced.
    k2 = jax.random.PRNGKey(1)
    x2 = jax.random.normal(k2, (3, 5, 260), dtype=jnp.float32)
    out2 = jax.block_until_ready(chomp1d(x2, 7, force_kernel=True, dma_chunks=4))
    assert bool(jnp.array_equal(out2, x2[:, :, :-7]))

    # bf16 (different sublane packing), chomp_size == 0 identity, and the
    # default small-input fast path.
    x3 = jax.random.normal(key, (2, 4, 16), dtype=jnp.bfloat16)
    out3 = jax.block_until_ready(chomp1d(x3, 4, force_kernel=True))
    assert bool(jnp.array_equal(out3, x3[:, :, :-4]))
    assert chomp1d(x3, 0) is x3
    out4 = jax.block_until_ready(chomp1d(x3, 4))  # fast path (no kernel launch)
    assert bool(jnp.array_equal(out4, x3[:, :, :-4]))

    print("KERNEL_OK")
</pallas_src>

<mosaic_0001>
module attributes {stable_mosaic.version = 11 : i64} {
  func.func @kernel(%arg0: memref<8x16xf32, #tpu.memory_space<any>>, %arg1: memref<8x13xf32, #tpu.memory_space<any>>, %arg2: memref<1x!tpu.dma_semaphore, #tpu.memory_space<semaphore_mem>>) attributes {dimension_semantics = [], scalar_prefetch = 0 : i64, scratch_operands = 1 : i64, tpu.core_type = #tpu.core_type<tc>} {
    %c0_i32 = arith.constant 0 : i32
    %c0_i32_0 = arith.constant 0 : i32
    %c0_i32_1 = arith.constant 0 : i32
    %0 = tpu.memref_slice %arg0[%c0_i32_0, %c0_i32_1] : memref<8x16xf32, #tpu.memory_space<any>> -> memref<8x13xf32, #tpu.memory_space<any>>
    %c0_i32_2 = arith.constant 0 : i32
    %c0_i32_3 = arith.constant 0 : i32
    %1 = tpu.memref_slice %arg1[%c0_i32_2, %c0_i32_3] : memref<8x13xf32, #tpu.memory_space<any>> -> memref<8x13xf32, #tpu.memory_space<any>>
    %2 = tpu.memref_slice %arg2[%c0_i32] : memref<1x!tpu.dma_semaphore, #tpu.memory_space<semaphore_mem>> -> memref<1x!tpu.dma_semaphore, #tpu.memory_space<semaphore_mem>>
    %3 = tpu.memref_squeeze %2 : memref<1x!tpu.dma_semaphore, #tpu.memory_space<semaphore_mem>> -> memref<!tpu.dma_semaphore, #tpu.memory_space<semaphore_mem>>
    tpu.enqueue_dma source(%0 : memref<8x13xf32, #tpu.memory_space<any>>) target(%1 : memref<8x13xf32, #tpu.memory_space<any>>) target_semaphore(%3 : memref<!tpu.dma_semaphore, #tpu.memory_space<semaphore_mem>>)
    %c0_i32_4 = arith.constant 0 : i32
    %c0_i32_5 = arith.constant 0 : i32
    %c0_i32_6 = arith.constant 0 : i32
    %4 = tpu.memref_slice %arg0[%c0_i32_5, %c0_i32_6] : memref<8x16xf32, #tpu.memory_space<any>> -> memref<8x13xf32, #tpu.memory_space<any>>
    %c0_i32_7 = arith.constant 0 : i32
    %c0_i32_8 = arith.constant 0 : i32
    %5 = tpu.memref_slice %arg1[%c0_i32_7, %c0_i32_8] : memref<8x13xf32, #tpu.memory_space<any>> -> memref<8x13xf32, #tpu.memory_space<any>>
    %6 = tpu.memref_slice %arg2[%c0_i32_4] : memref<1x!tpu.dma_semaphore, #tpu.memory_space<semaphore_mem>> -> memref<1x!tpu.dma_semaphore, #tpu.memory_space<semaphore_mem>>
    %7 = tpu.memref_squeeze %6 : memref<1x!tpu.dma_semaphore, #tpu.memory_space<semaphore_mem>> -> memref<!tpu.dma_semaphore, #tpu.memory_space<semaphore_mem>>
    tpu.wait_dma2 semaphore(%7 : memref<!tpu.dma_semaphore, #tpu.memory_space<semaphore_mem>>) src(%4 : memref<8x13xf32, #tpu.memory_space<any>>) dst(%5 : memref<8x13xf32, #tpu.memory_space<any>>)
    return
  }
}

module attributes {stable_mosaic.version = 11 : i64} {
  func.func @_chomp_copy_kernel(%arg0: i32, %arg1: i32, %arg2: memref<8x128xf32, #tpu.memory_space<vmem>>, %arg3: memref<8x128xf32, #tpu.memory_space<vmem>>) attributes {dimension_semantics = [#tpu.dimension_semantics<parallel>, #tpu.dimension_semantics<parallel>], iteration_bounds = array<i64: 1, 1>, scalar_prefetch = 0 : i64, scratch_operands = 0 : i64, tpu.core_type = #tpu.core_type<tc>, window_params = [{transform_indices = @transform_0, window_bounds = array<i64: 8, 128>}, {transform_indices = @transform_1, window_bounds = array<i64: 8, 128>}]} {
    %c0 = arith.constant 0 : index
    %c0_0 = arith.constant 0 : index
    %0 = vector.load %arg2[%c0, %c0_0] : memref<8x128xf32, #tpu.memory_space<vmem>>, vector<8x128xf32>
    %c0_1 = arith.constant 0 : index
    %c0_2 = arith.constant 0 : index
    %1 = vector.load %arg3[%c0_1, %c0_2] : memref<8x128xf32, #tpu.memory_space<vmem>>, vector<8x128xf32>
    tpu.vector_store %arg3[%c0_1, %c0_2], %0 {strides = array<i32>} : memref<8x128xf32, #tpu.memory_space<vmem>>, vector<8x128xf32>,
    return
  }
  func.func @transform_0(%arg0: i32, %arg1: i32) -> (i32, i32) {
    %c0_i32 = arith.constant 0 : i32
    return %arg0, %arg1 : i32, i32
  }
  func.func @transform_1(%arg0: i32, %arg1: i32) -> (i32, i32) {
    %c0_i32 = arith.constant 0 : i32
    return %arg0, %arg1 : i32, i32
  }
}

</mosaic_0001>

<llo_original>
// kernel: tpu_custom_call.1
$region0: #{tpu_custom_call.1}
  #allocation0 [shape = 'u32[]', space=smem, size = 0x4, offset = 0x4, fixed_abs, tag = 'smem constant byte address 0x4 - core index']
  #allocation1 [shape = 'u32[72,128]{1,0:T(1,128)}', space=vmem, size = 0x9000, scoped, tag = 'internal scratch']
  %s0 = inlined_call_operand.hbm [shape: f32[8,16], index: 0, kind: input, shape index: {}]
  %s1 = inlined_call_operand.hbm [shape: f32[8,13], index: 1, kind: output, shape index: {}]
  %s2 = sld [smem:[#allocation0]]
  $region18: #{tpu_custom_call.1} parent=0
    _
  %s4 = ssub.s32 1, %s2
  %s5 = scalar_select 0, %s4, %s2
  $region1: #{tpu_custom_call.1} parent=0
    #allocation2 [shape = 'u8[4096]{0}', space=vmem, size = 0x1000, scoped, tag = 'input window, operand 0, single buffered']
    #allocation3 [shape = 's32[1]{0}', space=sflag, size = 0x4, scoped, tag = 'scoped memory for tpu_custom_call.1']
    #allocation4 [shape = 's32[1]{0}', space=sflag, size = 0x4, scoped, tag = 'scoped memory for tpu_custom_call.1']
    #allocation5 [shape = 'u8[4096]{0}', space=vmem, size = 0x1000, scoped, tag = 'output window, operand 0, single buffered']
    %6 = vsyncpa [#allocation3], 0
    %7 = vsyncpa [#allocation4], 0
    // Predicated region
    $region2: #{tpu_custom_call.1} parent=1 // pred_check
      _
    $region3: #{tpu_custom_call.1} parent=1 // pred_check_branch
      %9 = sbr.rel (0) target = $region5
    $region4: #{tpu_custom_call.1} parent=1 // pred_region
      %11 = vsyncadd [#allocation3], 0
      %s13 = sshll.u32 %s0, 4
      %s14 = int_to_ptr.hbm [resolvable:$true] %s13
      %s15 = sshll.u32 [#allocation2], 4
      %s16 = int_to_ptr.vmem [resolvable:$true] %s15
      %18 = dma.hbm_to_vmem [thread:$0]  %s14, 128, %s16, [#allocation3]
    $region5: #{tpu_custom_call.1} parent=1 // pred_fallthru
      _
    // Predicated region
    $region6: #{tpu_custom_call.1} parent=1 // pred_check
      _
    $region7: #{tpu_custom_call.1} parent=1 // pred_check_branch
      %20 = sbr.rel (0) target = $region9
    $region8: #{tpu_custom_call.1} parent=1 // pred_region
      %22 = dma.done [#allocation3], 128
    $region9: #{tpu_custom_call.1} parent=1 // pred_fallthru
      _
    %v23 = vld [vmem:[#allocation2] sm:$0xff]
    %24 = vst [vmem:[#allocation5] sm:$0xff] %v23
    // Predicated region
    $region10: #{tpu_custom_call.1} parent=1 // pred_check
      _
    $region11: #{tpu_custom_call.1} parent=1 // pred_check_branch
      %26 = sbr.rel (0) target = $region13
    $region12: #{tpu_custom_call.1} parent=1 // pred_region
      %28 = vsyncadd [#allocation4], 0
      %s30 = sshll.u32 [#allocation5], 4
      %s31 = int_to_ptr.vmem [resolvable:$true] %s30
      %s32 = sshll.u32 %s1, 4
      %s33 = int_to_ptr.hbm [resolvable:$true] %s32
      %35 = dma.vmem_to_hbm [thread:$0]  %s31, 128, %s33, [#allocation4]
    $region13: #{tpu_custom_call.1} parent=1 // pred_fallthru
      _
    // Predicated region
    $region14: #{tpu_custom_call.1} parent=1 // pred_check
      _
    $region15: #{tpu_custom_call.1} parent=1 // pred_check_branch
      %37 = sbr.rel (0) target = $region17
    $region16: #{tpu_custom_call.1} parent=1 // pred_region
      %39 = dma.done [#allocation4], 128
    $region17: #{tpu_custom_call.1} parent=1 // pred_fallthru
      _
    %40 = vsyncpa [#allocation3], 1
    %41 = vsyncpa [#allocation4], 1

</llo_original>
